<compile_context>
chip_gen: v7x
topology: tpu7x:2x2x1
jax: 0.10.0
libtpu: 0.0.40
codegen_flags: <defaults>
</compile_context>

<pallas_src>
import jax
import jax.numpy as jnp
from jax.experimental import pallas as pl
from jax.experimental.pallas import tpu as pltpu

_LANE = 128                          # TPU lane width -> full-lane stores.
_TARGET_TILE_BYTES = 8 * 1024 * 1024  # ~8 MiB per buffer (dtype independent).


def _identity_kernel(x_ref, o_ref):
    # Identity forward: the abstract Norm base defines no transformation.
    o_ref[...] = x_ref[...]


def _sublane_multiple(dtype) -> int:
    """Rows per packed vreg: 8 for f32, 16 for bf16, 32 for int8/fp8."""
    itemsize = jnp.dtype(dtype).itemsize
    return 8 * max(1, 4 // itemsize)


def _copy_lane_dense(x2: jax.Array) -> jax.Array:
    """Tiled, aliased HBM->VMEM->HBM copy of a lane-dense 2D array (rows, 128)."""
    rows, lanes = x2.shape
    itemsize = jnp.dtype(x2.dtype).itemsize
    sub = _sublane_multiple(x2.dtype)

    # Constant-bytes tile (~8 MiB/buffer), rounded down to a sublane multiple.
    tile_rows = max(sub, (_TARGET_TILE_BYTES // (lanes * itemsize)) // sub * sub)
    if rows <= tile_rows:
        tile_m = rows      # block == full array dims: always a legal block shape
    else:
        tile_m = tile_rows  # multiple of sublane packing -> unmasked stores
    grid_m = pl.cdiv(rows, tile_m)

    tile_bytes = tile_m * lanes * itemsize
    # in + out, double-buffered, plus slack; stays well under v7x's 64 MiB VMEM.
    vmem_limit = max(16 << 20, min(4 * tile_bytes + (4 << 20), 48 << 20))

    return pl.pallas_call(
        _identity_kernel,
        out_shape=jax.ShapeDtypeStruct((rows, lanes), x2.dtype),
        grid=(grid_m,),
        in_specs=[pl.BlockSpec((tile_m, lanes), lambda i: (i, 0))],
        out_specs=pl.BlockSpec((tile_m, lanes), lambda i: (i, 0)),
        # Output aliases the input buffer: no second HBM allocation; callers
        # that donate the input get the identity nearly for free.
        input_output_aliases={0: 0},
        compiler_params=pltpu.CompilerParams(
            dimension_semantics=("parallel",),
            vmem_limit_bytes=vmem_limit,
        ),
        cost_estimate=pl.CostEstimate(
            flops=0,
            transcendentals=0,
            bytes_accessed=2 * rows * lanes * itemsize,
        ),
    )(x2)


def norm_forward(x: jax.Array) -> jax.Array:
    """Pallas identity forward for the abstract Norm base class.

    Accepts any shape (e.g. [batch, seq, hidden]); the copy is performed on a
    flattened, lane-dense view and reshaped back.
    """
    if x.size == 0:
        return x
    n = x.size
    flat = x.reshape(-1)

    if n % _LANE == 0:
        y2 = _copy_lane_dense(flat.reshape(n // _LANE, _LANE))
        return y2.reshape(x.shape)

    # Pad-and-slice fallback for element counts not divisible by 128: keeps
    # every case on the tiled, lane-dense, unmasked-store path (no (1, n)
    # single-block VMEM blow-up for large odd-sized inputs).
    sub = _sublane_multiple(x.dtype)
    chunk = sub * _LANE
    padded_n = pl.cdiv(n, chunk) * chunk
    padded = jnp.pad(flat, (0, padded_n - n))
    y2 = _copy_lane_dense(padded.reshape(padded_n // _LANE, _LANE))
    return y2.reshape(-1)[:n].reshape(x.shape)


if __name__ == "__main__":
    key = jax.random.PRNGKey(0)
    batch, seq, hidden = 2, 8, 32
    x = jax.random.normal(key, (batch, seq, hidden), dtype=jnp.float32)

    y = norm_forward(x)
    jax.block_until_ready(y)

    # Sanity check: abstract Norm forward has no defined compute -> identity.
    assert y.shape == x.shape and y.dtype == x.dtype
    assert bool(jnp.allclose(y, x))

    # Exercise the pad-and-slice fallback (element count not divisible by 128).
    x_odd = jax.random.normal(jax.random.PRNGKey(1), (3, 5, 7), dtype=jnp.float32)
    y_odd = norm_forward(x_odd)
    jax.block_until_ready(y_odd)
    assert y_odd.shape == x_odd.shape and bool(jnp.allclose(y_odd, x_odd))

    print("KERNEL_OK")
</pallas_src>

<mosaic_0001>
module attributes {stable_mosaic.version = 11 : i64} {
  func.func @_identity_kernel(%arg0: i32, %arg1: memref<4x128xf32, #tpu.memory_space<vmem>>, %arg2: memref<4x128xf32, #tpu.memory_space<vmem>>) attributes {dimension_semantics = [#tpu.dimension_semantics<parallel>], iteration_bounds = array<i64: 1>, scalar_prefetch = 0 : i64, scratch_operands = 0 : i64, tpu.core_type = #tpu.core_type<tc>, window_params = [{transform_indices = @transform_0, window_bounds = array<i64: 4, 128>}, {transform_indices = @transform_1, window_bounds = array<i64: 4, 128>}]} {
    %c0 = arith.constant 0 : index
    %c0_0 = arith.constant 0 : index
    %0 = vector.load %arg1[%c0, %c0_0] : memref<4x128xf32, #tpu.memory_space<vmem>>, vector<4x128xf32>
    %c0_1 = arith.constant 0 : index
    %c0_2 = arith.constant 0 : index
    %1 = vector.load %arg2[%c0_1, %c0_2] : memref<4x128xf32, #tpu.memory_space<vmem>>, vector<4x128xf32>
    tpu.vector_store %arg2[%c0_1, %c0_2], %0 {strides = array<i32>} : memref<4x128xf32, #tpu.memory_space<vmem>>, vector<4x128xf32>,
    return
  }
  func.func @transform_0(%arg0: i32) -> (i32, i32) {
    %c0_i32 = arith.constant 0 : i32
    %c0_i32_0 = arith.constant 0 : i32
    return %arg0, %c0_i32 : i32, i32
  }
  func.func @transform_1(%arg0: i32) -> (i32, i32) {
    %c0_i32 = arith.constant 0 : i32
    %c0_i32_0 = arith.constant 0 : i32
    return %arg0, %c0_i32 : i32, i32
  }
}

</mosaic_0001>

<llo_original>
// kernel: tpu_custom_call.1
$region0: #{tpu_custom_call.1}
  #allocation0 [shape = 'u32[]', space=smem, size = 0x4, offset = 0x4, fixed_abs, tag = 'smem constant byte address 0x4 - core index']
  #allocation1 [shape = 'u32[144,128]{1,0:T(1,128)}', space=vmem, size = 0x12000, scoped, tag = 'internal scratch']
  %s0 = inlined_call_operand.hbm [shape: f32[4,128], index: 0, kind: input, shape index: {}, may-alias: {0,1}]
  %s1 = inlined_call_operand.hbm [shape: f32[4,128], index: 1, kind: output, shape index: {}, may-alias: {0,1}]
  %s2 = sld [smem:[#allocation0]]
  $region18: #{tpu_custom_call.1} parent=0
    _
  %s4 = ssub.s32 1, %s2
  %s5 = scalar_select 0, %s4, %s2
  $region1: #{tpu_custom_call.1} parent=0
    #allocation2 [shape = 'u8[2048]{0}', space=vmem, size = 0x800, scoped, tag = 'input window, operand 0, single buffered']
    #allocation3 [shape = 's32[1]{0}', space=sflag, size = 0x4, scoped, tag = 'scoped memory for tpu_custom_call.1']
    #allocation4 [shape = 's32[1]{0}', space=sflag, size = 0x4, scoped, tag = 'scoped memory for tpu_custom_call.1']
    #allocation5 [shape = 'u8[2048]{0}', space=vmem, size = 0x800, scoped, tag = 'output window, operand 0, single buffered']
    %6 = vsyncpa [#allocation3], 0
    %7 = vsyncpa [#allocation4], 0
    // Predicated region
    $region2: #{tpu_custom_call.1} parent=1 // pred_check
      _
    $region3: #{tpu_custom_call.1} parent=1 // pred_check_branch
      %9 = sbr.rel (0) target = $region5
    $region4: #{tpu_custom_call.1} parent=1 // pred_region
      %s11 = ssub.s32 64, 64
      %12 = vsyncadd [#allocation3], %s11
      %s14 = sshll.u32 [#allocation2], 4
      %s15 = int_to_ptr.vmem [resolvable:$true] %s14
      %17 = dma.hbm_to_vmem [thread:$0]  %s0, 64, %s15, [#allocation3]
    $region5: #{tpu_custom_call.1} parent=1 // pred_fallthru
      _
    // Predicated region
    $region6: #{tpu_custom_call.1} parent=1 // pred_check
      _
    $region7: #{tpu_custom_call.1} parent=1 // pred_check_branch
      %19 = sbr.rel (0) target = $region9
    $region8: #{tpu_custom_call.1} parent=1 // pred_region
      %20 = dma.done [#allocation3], 64
    $region9: #{tpu_custom_call.1} parent=1 // pred_fallthru
      _
    %v21 = vld [vmem:[#allocation2] sm:$0xf]
    %22 = vst [vmem:[#allocation5] sm:$0xf] %v21
    // Predicated region
    $region10: #{tpu_custom_call.1} parent=1 // pred_check
      _
    $region11: #{tpu_custom_call.1} parent=1 // pred_check_branch
      %24 = sbr.rel (0) target = $region13
    $region12: #{tpu_custom_call.1} parent=1 // pred_region
      %s26 = ssub.s32 64, 64
      %27 = vsyncadd [#allocation4], %s26
      %s29 = sshll.u32 [#allocation5], 4
      %s30 = int_to_ptr.vmem [resolvable:$true] %s29
      %32 = dma.vmem_to_hbm [thread:$0]  %s30, 64, %s1, [#allocation4]
    $region13: #{tpu_custom_call.1} parent=1 // pred_fallthru
      _
    // Predicated region
    $region14: #{tpu_custom_call.1} parent=1 // pred_check
      _
    $region15: #{tpu_custom_call.1} parent=1 // pred_check_branch
      %34 = sbr.rel (0) target = $region17
    $region16: #{tpu_custom_call.1} parent=1 // pred_region
      %35 = dma.done [#allocation4], 64
    $region17: #{tpu_custom_call.1} parent=1 // pred_fallthru
      _
    %36 = vsyncpa [#allocation3], 1
    %37 = vsyncpa [#allocation4], 1

</llo_original>
